<compile_context>
chip_gen: v6e
topology: v6e:2x2x1
jax: 0.10.0
libtpu: 0.0.40
codegen_flags: <defaults>
</compile_context>

<pallas_src>
import functools

import jax
import jax.numpy as jnp
from jax import lax
from jax.experimental import pallas as pl
from jax.experimental.pallas import tpu as pltpu


# ----------------------------------------------------------------------------
# Kernel 1: farthest point sampling (one batch element per grid step)
# ----------------------------------------------------------------------------
def fps_kernel(pts_ref, ptst_ref, idx_ref, mind_ref):
    # pts_ref:  (1, D0, 8, N/8) VMEM f32  -- sublane-dense channel rows
    # ptst_ref: (1, N, D0)      VMEM f32  -- seq-major, O(1) selected-point reads
    # idx_ref:  (1, 1, K)       VMEM int32 output
    # mind_ref: (8, N/8)        VMEM f32 scratch (running min squared distance)
    d0 = pts_ref.shape[1]
    n8 = pts_ref.shape[3]
    n = 8 * n8
    k_total = idx_ref.shape[2]

    # bits reserved for the (inverted) index in the packed argmax key
    ib = max(1, (n - 1).bit_length())
    low_mask = (1 << ib) - 1
    hi_mask = jnp.int32(-(1 << ib))

    # flat point index per (sublane, lane) slot; inverted so a single max-reduce
    # breaks distance ties toward the smallest original index (first-argmax).
    iota_flat = (lax.broadcasted_iota(jnp.int32, (8, n8), 0) * n8
                 + lax.broadcasted_iota(jnp.int32, (8, n8), 1))
    inv_idx = (n - 1) - iota_flat
    iota_k = lax.broadcasted_iota(jnp.int32, (1, k_total), 1)

    # ||p_i||^2 once, in dense (8, N/8) vregs.
    sq = jnp.zeros((8, n8), jnp.float32)
    for j in range(d0):
        row = pts_ref[0, j]
        sq = sq + row * row

    mind_ref[...] = jnp.full((8, n8), 1e10, dtype=jnp.float32)

    def body(k, carry):
        farthest, idx_vec = carry
        # record the current selection at position k
        idx_vec = jnp.where(iota_k == k, farthest, idx_vec)

        # selected point: O(1) dynamic sublane read -> (1, D0)
        cur = ptst_ref[0, pl.ds(farthest, 1), :]

        # ||p_i - p_f||^2 = ||p_i||^2 + ||p_f||^2 - 2 <p_i, p_f>
        cross = jnp.zeros((8, n8), jnp.float32)
        sqf = jnp.zeros((1, 1), jnp.float32)
        for j in range(d0):
            cj = cur[0:1, j:j + 1]                            # (1, 1)
            cross = cross + cj * pts_ref[0, j]
            sqf = sqf + cj * cj
        d = sq + sqf - 2.0 * cross                            # (8, N/8)

        mind = jnp.minimum(mind_ref[...], d)
        mind_ref[...] = mind

        # fused max + first-argmax: one reduction on a monotonic packed int32 key
        # (distance bits in the high bits, inverted index in the low ib bits).
        dist_bits = pltpu.bitcast(mind, jnp.int32)
        key = (dist_bits & hi_mask) | inv_idx
        best = jnp.max(key)
        farthest = ((n - 1) - (best & low_mask)).astype(jnp.int32)
        return farthest, idx_vec

    init = (jnp.array(0, dtype=jnp.int32), jnp.zeros((1, k_total), jnp.int32))
    _, idx_vec = lax.fori_loop(0, k_total, body, init)
    idx_ref[0] = idx_vec


def fps_indices(points, k):
    """Greedy deterministic FPS (first point = index 0). Returns (B, K) int32."""
    b, d0, n = points.shape
    assert n % 8 == 0, "FPS kernel assumes N divisible by 8"
    n8 = n // 8
    pts4 = points.reshape(b, d0, 8, n8)            # free row-major reshape
    pts_t = jnp.transpose(points, (0, 2, 1))       # (B, N, D0), tiny copy
    idx = pl.pallas_call(
        fps_kernel,
        out_shape=jax.ShapeDtypeStruct((b, 1, k), jnp.int32),
        grid_spec=pltpu.PrefetchScalarGridSpec(
            num_scalar_prefetch=0,
            grid=(b,),
            in_specs=[pl.BlockSpec((1, d0, 8, n8), lambda i: (i, 0, 0, 0)),
                      pl.BlockSpec((1, n, d0), lambda i: (i, 0, 0))],
            out_specs=pl.BlockSpec((1, 1, k), lambda i: (i, 0, 0)),
            scratch_shapes=[pltpu.VMEM((8, n8), jnp.float32)]),
        compiler_params=pltpu.CompilerParams(
            dimension_semantics=("parallel",)),
    )(pts4, pts_t)
    return idx[:, 0, :]                            # (B, K)


# ----------------------------------------------------------------------------
# Kernel 2: cross_transformer with online-softmax KV tiling
#   grid = (B, N // TILE_N); B "parallel", KV "arbitrary" (output resident per B)
# ----------------------------------------------------------------------------
def cross_transformer_kernel(
        xg_ref, x0_ref,
        wp_ref, bp_ref, ln13w_ref, ln13b_ref,
        wq_ref, wk_ref, wv_ref, bq_ref, bk_ref, bv_ref,
        wo_ref, bo_ref, ln12w_ref, ln12b_ref,
        w11_ref, b11_ref, w12_ref, b12_ref,
        out_ref,
        qsrc_sc, qh_sc, m_sc, l_sc, acc_sc,
        *, nhead):
    c = wp_ref.shape[1]
    hd = c // nhead
    scale = 1.0 / float(hd) ** 0.5
    kv_i = pl.program_id(1)
    n_kv = pl.num_programs(1)

    wp = wp_ref[...]                      # (D, C) bf16
    bp = bp_ref[...]                      # (1, C) f32
    ln13w, ln13b = ln13w_ref[...], ln13b_ref[...]

    def layernorm(x, w, b):
        mu = jnp.mean(x, axis=-1, keepdims=True)
        var = jnp.mean(jnp.square(x - mu), axis=-1, keepdims=True)
        return (x - mu) * lax.rsqrt(var + 1e-5) * w + b

    # channel-major activations: contract over the leading D axis directly
    # (no host-side transpose of x0 / x_g0, no in-kernel .T).
    def proj_in(x_dm):                    # (D, M) bf16 -> norm13(conv1d) (M, C) f32
        s = lax.dot_general(x_dm, wp, (((0,), (0,)), ((), ())),
                            preferred_element_type=jnp.float32) + bp
        return layernorm(s, ln13w, ln13b)

    # ---- first KV step: build query-side state once, zero online-softmax state ----
    @pl.when(kv_i == 0)
    def _init():
        q_src = proj_in(xg_ref[0].astype(jnp.bfloat16))                   # (K, C) f32
        qsrc_sc[...] = q_src
        qb = jnp.broadcast_to(q_src.astype(jnp.bfloat16)[None],
                              (nhead,) + q_src.shape)                     # (H, K, C)
        qh = jnp.einsum('hkc,hcd->hkd', qb, wq_ref[...],
                        preferred_element_type=jnp.float32) + bq_ref[...]
        qh_sc[...] = (qh * scale).astype(jnp.bfloat16)                    # (H, K, hd)
        m_sc[...] = jnp.full(m_sc.shape, -jnp.inf, jnp.float32)
        l_sc[...] = jnp.zeros(l_sc.shape, jnp.float32)
        acc_sc[...] = jnp.zeros(acc_sc.shape, jnp.float32)

    # ---- every KV step: project this KV tile and do an online-softmax update ----
    kv_src = proj_in(x0_ref[0].astype(jnp.bfloat16)).astype(jnp.bfloat16)  # (Tn, C)
    kvb = jnp.broadcast_to(kv_src[None], (nhead,) + kv_src.shape)          # (H, Tn, C)
    kh = (jnp.einsum('hnc,hcd->hnd', kvb, wk_ref[...],
                     preferred_element_type=jnp.float32)
          + bk_ref[...]).astype(jnp.bfloat16)                              # (H, Tn, hd)
    vh = (jnp.einsum('hnc,hcd->hnd', kvb, wv_ref[...],
                     preferred_element_type=jnp.float32)
          + bv_ref[...]).astype(jnp.bfloat16)

    qh = qh_sc[...]                                                        # (H, K, hd)
    s = jnp.einsum('hkd,hnd->hkn', qh, kh,
                   preferred_element_type=jnp.float32)                     # (H, K, Tn)
    m_prev = m_sc[...]
    m_new = jnp.maximum(m_prev, jnp.max(s, axis=-1, keepdims=True))
    alpha = jnp.exp(m_prev - m_new)
    p = jnp.exp(s - m_new)
    l_sc[...] = alpha * l_sc[...] + jnp.sum(p, axis=-1, keepdims=True)
    acc_sc[...] = alpha * acc_sc[...] + jnp.einsum(
        'hkn,hnd->hkd', p.astype(jnp.bfloat16), vh,
        preferred_element_type=jnp.float32)
    m_sc[...] = m_new

    # ---- last KV step: out-proj, residual+norm12, FFN, channel-major store ----
    @pl.when(kv_i == n_kv - 1)
    def _finalize():
        o = acc_sc[...] * pl.reciprocal(l_sc[...], approx=True)            # (H, K, hd)
        oh = jnp.einsum('hkd,hdc->hkc', o.astype(jnp.bfloat16), wo_ref[...],
                        preferred_element_type=jnp.float32)                # (H, K, C)
        attn = jnp.sum(oh, axis=0) + bo_ref[...]                           # (K, C)

        x = layernorm(qsrc_sc[...] + attn, ln12w_ref[...], ln12b_ref[...])
        h1 = jnp.dot(x.astype(jnp.bfloat16), w11_ref[...],
                     preferred_element_type=jnp.float32) + b11_ref[...]
        h1 = jax.nn.gelu(h1, approximate=False)
        h2 = jnp.dot(h1.astype(jnp.bfloat16), w12_ref[...],
                     preferred_element_type=jnp.float32) + b12_ref[...]
        x = x + h2                                                         # (K, C)

        # channel-major store (B, C, K): lane-dense for K >= 128 and removes
        # the external XLA transpose of the attention output.
        out_ref[0] = jnp.transpose(x, (1, 0)).astype(out_ref.dtype)


def cross_transformer_apply(x_g0, x0, kp, nhead):
    b, d, k = x_g0.shape
    _, _, n = x0.shape
    c = kp["wp_t"].shape[1]
    hd = c // nhead

    # KV tile size: bounds VMEM for the online-softmax loop; full N for small N.
    if n <= 512:
        tile_n = n
    else:
        tile_n = next((t for t in (512, 256, 128) if n % t == 0), n)
    assert n % tile_n == 0
    n_kv = n // tile_n

    weight_args = [
        kp["wp_t"], kp["b_proj"], kp["ln13_w"], kp["ln13_b"],
        kp["wq_h"], kp["wk_h"], kp["wv_h"],
        kp["bq_h"], kp["bk_h"], kp["bv_h"],
        kp["wout_h"], kp["b_out"],
        kp["ln12_w"], kp["ln12_b"],
        kp["w11_t"], kp["b11"], kp["w12_t"], kp["b12"],
    ]

    def const_spec(a):
        return pl.BlockSpec(a.shape, lambda i, j, nd=a.ndim: (0,) * nd)

    in_specs = ([pl.BlockSpec((1, d, k), lambda i, j: (i, 0, 0)),
                 pl.BlockSpec((1, d, tile_n), lambda i, j: (i, 0, j))]
                + [const_spec(a) for a in weight_args])
    out_spec = pl.BlockSpec((1, c, k), lambda i, j: (i, 0, 0))

    return pl.pallas_call(
        functools.partial(cross_transformer_kernel, nhead=nhead),
        out_shape=jax.ShapeDtypeStruct((b, c, k), jnp.float32),
        grid_spec=pltpu.PrefetchScalarGridSpec(
            num_scalar_prefetch=0,
            grid=(b, n_kv),                                   # KV axis innermost
            in_specs=in_specs,
            out_specs=out_spec,
            scratch_shapes=[
                pltpu.VMEM((k, c), jnp.float32),              # q_src (residual)
                pltpu.VMEM((nhead, k, hd), jnp.bfloat16),     # scaled query heads
                pltpu.VMEM((nhead, k, 1), jnp.float32),       # running max
                pltpu.VMEM((nhead, k, 1), jnp.float32),       # running sum
                pltpu.VMEM((nhead, k, hd), jnp.float32),      # PV accumulator
            ]),
        compiler_params=pltpu.CompilerParams(
            dimension_semantics=("parallel", "arbitrary"),
            vmem_limit_bytes=48 * 1024 * 1024),
    )(x_g0, x0, *weight_args)


# ----------------------------------------------------------------------------
# Parameters (torch-layout synthetic init) + host-side preparation
# ----------------------------------------------------------------------------
def init_params(key, d_model, d_model_out, dim_feedforward):
    c = d_model_out
    ks = jax.random.split(key, 8)
    return {
        # Conv1d(d_model, d_model_out, kernel_size=1): weight (C, D)
        "w_proj": jax.random.normal(ks[0], (c, d_model), jnp.float32) * 0.05,
        "b_proj": jax.random.normal(ks[1], (1, c), jnp.float32) * 0.05,
        # LayerNorms
        "ln13_w": jnp.ones((1, c), jnp.float32),
        "ln13_b": jnp.zeros((1, c), jnp.float32),
        "ln12_w": jnp.ones((1, c), jnp.float32),
        "ln12_b": jnp.zeros((1, c), jnp.float32),
        # MultiheadAttention in_proj (3C, C) + out_proj (C, C)
        "w_in": jax.random.normal(ks[2], (3 * c, c), jnp.float32) * 0.05,
        "b_in": jax.random.normal(ks[3], (1, 3 * c), jnp.float32) * 0.05,
        "w_out": jax.random.normal(ks[4], (c, c), jnp.float32) * 0.05,
        "b_out": jax.random.normal(ks[5], (1, c), jnp.float32) * 0.05,
        # FFN
        "w11": jax.random.normal(ks[6], (dim_feedforward, c), jnp.float32) * 0.05,
        "b11": jnp.zeros((1, dim_feedforward), jnp.float32),
        "w12": jax.random.normal(ks[7], (c, dim_feedforward), jnp.float32) * 0.05,
        "b12": jnp.zeros((1, c), jnp.float32),
    }


def prepare_params(p, nhead):
    """Pre-transpose / head-split / bf16-cast weights once on the host."""
    c = p["w_proj"].shape[0]
    hd = c // nhead
    bf16, f32 = jnp.bfloat16, jnp.float32
    w_in = p["w_in"]                               # (3C, C) torch layout
    b_in = p["b_in"].reshape(3 * c)                # (3C,)

    def head_w(w):                                 # (C, C) -> (H, C, hd)
        return jnp.transpose(w, (1, 0)).reshape(c, nhead, hd).transpose(1, 0, 2).astype(bf16)

    def head_b(bvec):                              # (C,) -> (H, 1, hd)
        return bvec.reshape(nhead, hd)[:, None, :].astype(f32)

    return {
        "wp_t": jnp.transpose(p["w_proj"], (1, 0)).astype(bf16),        # (D, C)
        "b_proj": p["b_proj"].astype(f32),
        "ln13_w": p["ln13_w"].astype(f32), "ln13_b": p["ln13_b"].astype(f32),
        "wq_h": head_w(w_in[0:c]),
        "wk_h": head_w(w_in[c:2 * c]),
        "wv_h": head_w(w_in[2 * c:3 * c]),
        "bq_h": head_b(b_in[0:c]),
        "bk_h": head_b(b_in[c:2 * c]),
        "bv_h": head_b(b_in[2 * c:3 * c]),
        "wout_h": jnp.transpose(p["w_out"], (1, 0)).reshape(nhead, hd, c).astype(bf16),
        "b_out": p["b_out"].astype(f32),
        "ln12_w": p["ln12_w"].astype(f32), "ln12_b": p["ln12_b"].astype(f32),
        "w11_t": jnp.transpose(p["w11"], (1, 0)).astype(bf16),          # (C, FF)
        "b11": p["b11"].astype(f32),
        "w12_t": jnp.transpose(p["w12"], (1, 0)).astype(bf16),          # (FF, C)
        "b12": p["b12"].astype(f32),
    }


# ----------------------------------------------------------------------------
# GDP_Block.forward
# ----------------------------------------------------------------------------
def gdp_block_forward(points, x0, kparams, n_div, nhead):
    b, d0, n = points.shape
    _, d, _ = x0.shape
    k = n // n_div

    # farthest point sampling (deterministic greedy FPS starting from index 0)
    idx = fps_indices(points, k)                                     # (B, K) int32

    # sampled points (B, D0, K) and gathered features x_g0 (B, D, K).
    # (x_g0 is needed outside the kernel anyway for the channel concat, so the
    #  gather runs once here; no transposed / recast copies of x0 are made.)
    points_s = jnp.take_along_axis(
        points, jnp.broadcast_to(idx[:, None, :], (b, d0, k)), axis=2)
    x_g0 = jnp.take_along_axis(
        x0, jnp.broadcast_to(idx[:, None, :], (b, d, k)), axis=2)

    # x1 = attention(x_g0, x0): channel-major (B, C, K) straight from the kernel
    x1_att = cross_transformer_apply(x_g0, x0, kparams, nhead)

    # x1 = cat([x_g0, x1], dim=1)
    x1 = jnp.concatenate([x_g0, x1_att], axis=1)
    return x1, points_s


if __name__ == "__main__":
    # small shapes consistent with the module
    B, D0, N = 2, 3, 32          # points: (B, 3, N)
    D_MODEL = 32                 # x0 channels / d_model
    D_MODEL_OUT = 32
    DIM_FF = 64
    NHEAD = 4
    N_DIV = 4

    key = jax.random.PRNGKey(0)
    kp_, kx_, kparam_ = jax.random.split(key, 3)
    points = jax.random.normal(kp_, (B, D0, N), jnp.float32)
    x0 = jax.random.normal(kx_, (B, D_MODEL, N), jnp.float32)
    params = init_params(kparam_, D_MODEL, D_MODEL_OUT, DIM_FF)
    kernel_params = prepare_params(params, NHEAD)

    x1, pts_s = gdp_block_forward(points, x0, kernel_params, N_DIV, NHEAD)
    x1, pts_s = jax.block_until_ready((x1, pts_s))

    K = N // N_DIV
    assert x1.shape == (B, D_MODEL + D_MODEL_OUT, K), x1.shape
    assert pts_s.shape == (B, D0, K), pts_s.shape
    assert bool(jnp.all(jnp.isfinite(x1)))
    assert bool(jnp.all(jnp.isfinite(pts_s)))
    print("KERNEL_OK")
</pallas_src>

<mosaic_0001>
module attributes {stable_mosaic.version = 11 : i64} {
  func.func @fps_kernel(%arg0: i32, %arg1: memref<1x3x8x4xf32, #tpu.memory_space<vmem>>, %arg2: memref<1x32x3xf32, #tpu.memory_space<vmem>>, %arg3: memref<1x1x8xi32, #tpu.memory_space<vmem>>, %arg4: memref<8x4xf32, #tpu.memory_space<vmem>>) attributes {dimension_semantics = [#tpu.dimension_semantics<parallel>], iteration_bounds = array<i64: 2>, scalar_prefetch = 0 : i64, scratch_operands = 1 : i64, tpu.core_type = #tpu.core_type<tc>, window_params = [{transform_indices = @transform_0, window_bounds = array<i64: 1, 3, 8, 4>}, {transform_indices = @transform_1, window_bounds = array<i64: 1, 32, 3>}, {transform_indices = @transform_2, window_bounds = array<i64: 1, 1, 8>}]} {
    %0 = tpu.iota {dimensions = array<i32: 0>} : vector<8x4xi32>
    %c4_i32 = arith.constant 4 : i32
    %1 = vector.broadcast %c4_i32 : i32 to vector<8x4xi32>
    %2 = arith.muli %0, %1 : vector<8x4xi32>
    %3 = tpu.iota {dimensions = array<i32: 1>} : vector<8x4xi32>
    %4 = arith.addi %2, %3 : vector<8x4xi32>
    %c31_i32 = arith.constant 31 : i32
    %5 = vector.broadcast %c31_i32 : i32 to vector<8x4xi32>
    %6 = arith.subi %5, %4 : vector<8x4xi32>
    %7 = tpu.iota {dimensions = array<i32: 1>} : vector<1x8xi32>
    %cst = arith.constant 0.000000e+00 : f32
    %8 = vector.broadcast %cst : f32 to vector<8x4xf32>
    %c0 = arith.constant 0 : index
    %c0_0 = arith.constant 0 : index
    %c0_1 = arith.constant 0 : index
    %c0_2 = arith.constant 0 : index
    %9 = vector.load %arg1[%c0, %c0_0, %c0_1, %c0_2] : memref<1x3x8x4xf32, #tpu.memory_space<vmem>>, vector<1x1x8x4xf32>
    %10 = vector.shape_cast %9 : vector<1x1x8x4xf32> to vector<8x4xf32>
    %11 = arith.mulf %10, %10 : vector<8x4xf32>
    %12 = arith.addf %8, %11 : vector<8x4xf32>
    %c0_3 = arith.constant 0 : index
    %c1 = arith.constant 1 : index
    %c0_4 = arith.constant 0 : index
    %c0_5 = arith.constant 0 : index
    %13 = vector.load %arg1[%c0_3, %c1, %c0_4, %c0_5] : memref<1x3x8x4xf32, #tpu.memory_space<vmem>>, vector<1x1x8x4xf32>
    %14 = vector.shape_cast %13 : vector<1x1x8x4xf32> to vector<8x4xf32>
    %15 = arith.mulf %14, %14 : vector<8x4xf32>
    %16 = arith.addf %12, %15 : vector<8x4xf32>
    %c0_6 = arith.constant 0 : index
    %c2 = arith.constant 2 : index
    %c0_7 = arith.constant 0 : index
    %c0_8 = arith.constant 0 : index
    %17 = vector.load %arg1[%c0_6, %c2, %c0_7, %c0_8] : memref<1x3x8x4xf32, #tpu.memory_space<vmem>>, vector<1x1x8x4xf32>
    %18 = vector.shape_cast %17 : vector<1x1x8x4xf32> to vector<8x4xf32>
    %19 = arith.mulf %18, %18 : vector<8x4xf32>
    %20 = arith.addf %16, %19 : vector<8x4xf32>
    %cst_9 = arith.constant 1.000000e+10 : f32
    %21 = vector.broadcast %cst_9 : f32 to vector<8x4xf32>
    %c0_10 = arith.constant 0 : index
    %c0_11 = arith.constant 0 : index
    %22 = vector.load %arg4[%c0_10, %c0_11] : memref<8x4xf32, #tpu.memory_space<vmem>>, vector<8x4xf32>
    tpu.vector_store %arg4[%c0_10, %c0_11], %21 {strides = array<i32>} : memref<8x4xf32, #tpu.memory_space<vmem>>, vector<8x4xf32>,
    %c0_i32 = arith.constant 0 : i32
    %23 = vector.broadcast %c0_i32 : i32 to vector<1x8xi32>
    %c-32_i32 = arith.constant -32 : i32
    %c0_i32_12 = arith.constant 0 : i32
    %c0_i32_13 = arith.constant 0 : i32
    %c8_i32 = arith.constant 8 : i32
    %24 = arith.addi %c0_i32_13, %c8_i32 : i32
    %c1_i32 = arith.constant 1 : i32
    %25:2 = scf.for %arg5 = %c0_i32_13 to %24 step %c1_i32 iter_args(%arg6 = %c0_i32_12, %arg7 = %23) -> (i32, vector<1x8xi32>)  : i32 {
      %29 = vector.broadcast %arg5 : i32 to vector<1x8xi32>
      %30 = arith.cmpi eq, %7, %29 : vector<1x8xi32>
      %31 = vector.broadcast %arg6 : i32 to vector<1x8xi32>
      %32 = arith.select %30, %31, %arg7 : vector<1x8xi1>, vector<1x8xi32>
      %c0_18 = arith.constant 0 : index
      %33 = arith.index_cast %arg6 : i32 to index
      %c0_19 = arith.constant 0 : index
      %34 = vector.load %arg2[%c0_18, %33, %c0_19] : memref<1x32x3xf32, #tpu.memory_space<vmem>>, vector<1x1x3xf32>
      %35 = vector.shape_cast %34 : vector<1x1x3xf32> to vector<1x3xf32>
      %cst_20 = arith.constant 0.000000e+00 : f32
      %36 = vector.broadcast %cst_20 : f32 to vector<8x4xf32>
      %cst_21 = arith.constant 0.000000e+00 : f32
      %37 = vector.broadcast %cst_21 : f32 to vector<1x1xf32>
      %38 = vector.extract_strided_slice %35 {offsets = [0, 0], sizes = [1, 1], strides = [1, 1]} : vector<1x3xf32> to vector<1x1xf32>
      %c0_22 = arith.constant 0 : index
      %c0_23 = arith.constant 0 : index
      %c0_24 = arith.constant 0 : index
      %c0_25 = arith.constant 0 : index
      %39 = vector.load %arg1[%c0_22, %c0_23, %c0_24, %c0_25] : memref<1x3x8x4xf32, #tpu.memory_space<vmem>>, vector<1x1x8x4xf32>
      %40 = vector.shape_cast %39 : vector<1x1x8x4xf32> to vector<8x4xf32>
      %41 = vector.broadcast %38 : vector<1x1xf32> to vector<8x4xf32>
      %42 = arith.mulf %41, %40 : vector<8x4xf32>
      %43 = arith.addf %36, %42 : vector<8x4xf32>
      %44 = arith.mulf %38, %38 : vector<1x1xf32>
      %45 = arith.addf %37, %44 : vector<1x1xf32>
      %46 = vector.extract_strided_slice %35 {offsets = [0, 1], sizes = [1, 1], strides = [1, 1]} : vector<1x3xf32> to vector<1x1xf32>
      %c0_26 = arith.constant 0 : index
      %c1_27 = arith.constant 1 : index
      %c0_28 = arith.constant 0 : index
      %c0_29 = arith.constant 0 : index
      %47 = vector.load %arg1[%c0_26, %c1_27, %c0_28, %c0_29] : memref<1x3x8x4xf32, #tpu.memory_space<vmem>>, vector<1x1x8x4xf32>
      %48 = vector.shape_cast %47 : vector<1x1x8x4xf32> to vector<8x4xf32>
      %49 = vector.broadcast %46 : vector<1x1xf32> to vector<8x4xf32>
      %50 = arith.mulf %49, %48 : vector<8x4xf32>
      %51 = arith.addf %43, %50 : vector<8x4xf32>
      %52 = arith.mulf %46, %46 : vector<1x1xf32>
      %53 = arith.addf %45, %52 : vector<1x1xf32>
      %54 = vector.extract_strided_slice %35 {offsets = [0, 2], sizes = [1, 1], strides = [1, 1]} : vector<1x3xf32> to vector<1x1xf32>
      %c0_30 = arith.constant 0 : index
      %c2_31 = arith.constant 2 : index
      %c0_32 = arith.constant 0 : index
      %c0_33 = arith.constant 0 : index
      %55 = vector.load %arg1[%c0_30, %c2_31, %c0_32, %c0_33] : memref<1x3x8x4xf32, #tpu.memory_space<vmem>>, vector<1x1x8x4xf32>
      %56 = vector.shape_cast %55 : vector<1x1x8x4xf32> to vector<8x4xf32>
      %57 = vector.broadcast %54 : vector<1x1xf32> to vector<8x4xf32>
      %58 = arith.mulf %57, %56 : vector<8x4xf32>
      %59 = arith.addf %51, %58 : vector<8x4xf32>
      %60 = arith.mulf %54, %54 : vector<1x1xf32>
      %61 = arith.addf %53, %60 : vector<1x1xf32>
      %62 = vector.broadcast %61 : vector<1x1xf32> to vector<8x4xf32>
      %63 = arith.addf %20, %62 : vector<8x4xf32>
      %cst_34 = arith.constant 2.000000e+00 : f32
      %64 = vector.broadcast %cst_34 : f32 to vector<8x4xf32>
      %65 = arith.mulf %64, %59 : vector<8x4xf32>
      %66 = arith.subf %63, %65 : vector<8x4xf32>
      %c0_35 = arith.constant 0 : index
      %c0_36 = arith.constant 0 : index
      %67 = vector.load %arg4[%c0_35, %c0_36] : memref<8x4xf32, #tpu.memory_space<vmem>>, vector<8x4xf32>
      %68 = arith.minimumf %67, %66 : vector<8x4xf32>
      %c0_37 = arith.constant 0 : index
      %c0_38 = arith.constant 0 : index
      %69 = vector.load %arg4[%c0_37, %c0_38] : memref<8x4xf32, #tpu.memory_space<vmem>>, vector<8x4xf32>
      tpu.vector_store %arg4[%c0_37, %c0_38], %68 {strides = array<i32>} : memref<8x4xf32, #tpu.memory_space<vmem>>, vector<8x4xf32>,
      %70 = tpu.bitcast %68 : vector<8x4xf32> -> vector<8x4xi32>
      %71 = vector.broadcast %c-32_i32 : i32 to vector<8x4xi32>
      %72 = arith.andi %70, %71 : vector<8x4xi32>
      %73 = arith.ori %72, %6 : vector<8x4xi32>
      %74 = vector.shape_cast %73 : vector<8x4xi32> to vector<1x8x4xi32>
      %cst_39 = arith.constant dense<-2147483648> : vector<1xi32>
      %75 = vector.multi_reduction <maxsi>, %74, %cst_39 [1, 2] : vector<1x8x4xi32> to vector<1xi32>
      %76 = vector.shape_cast %75 : vector<1xi32> to vector<1x1x1xi32>
      %77 = vector.extract %76[0, 0, 0] : i32 from vector<1x1x1xi32>
      %c31_i32_40 = arith.constant 31 : i32
      %78 = arith.andi %77, %c31_i32_40 : i32
      %c31_i32_41 = arith.constant 31 : i32
      %79 = arith.subi %c31_i32_41, %78 : i32
      scf.yield %79, %32 : i32, vector<1x8xi32>
    }
    %c8_i32_14 = arith.constant 8 : i32
    %c0_15 = arith.constant 0 : index
    %c0_16 = arith.constant 0 : index
    %c0_17 = arith.constant 0 : index
    %26 = vector.load %arg3[%c0_15, %c0_16, %c0_17] : memref<1x1x8xi32, #tpu.memory_space<vmem>>, vector<1x1x8xi32>
    %27 = vector.shape_cast %26 : vector<1x1x8xi32> to vector<1x8xi32>
    %28 = vector.shape_cast %25#1 : vector<1x8xi32> to vector<1x1x8xi32>
    tpu.vector_store %arg3[%c0_15, %c0_16, %c0_17], %28 {strides = array<i32>} : memref<1x1x8xi32, #tpu.memory_space<vmem>>, vector<1x1x8xi32>,
    return
  }
  func.func @transform_0(%arg0: i32) -> (i32, i32, i32, i32) {
    %c0_i32 = arith.constant 0 : i32
    %c0_i32_0 = arith.constant 0 : i32
    %c0_i32_1 = arith.constant 0 : i32
    %c0_i32_2 = arith.constant 0 : i32
    return %arg0, %c0_i32, %c0_i32_0, %c0_i32_1 : i32, i32, i32, i32
  }
  func.func @transform_1(%arg0: i32) -> (i32, i32, i32) {
    %c0_i32 = arith.constant 0 : i32
    %c0_i32_0 = arith.constant 0 : i32
    %c0_i32_1 = arith.constant 0 : i32
    return %arg0, %c0_i32, %c0_i32_0 : i32, i32, i32
  }
  func.func @transform_2(%arg0: i32) -> (i32, i32, i32) {
    %c0_i32 = arith.constant 0 : i32
    %c0_i32_0 = arith.constant 0 : i32
    %c0_i32_1 = arith.constant 0 : i32
    return %arg0, %c0_i32, %c0_i32_0 : i32, i32, i32
  }
}

</mosaic_0001>

<llo_original>
// kernel: tpu_custom_call.1
$region0: #{tpu_custom_call.1}
  #allocation0 [shape = 'u32[]', space=smem, size = 0x4, offset = 0x4, fixed_abs, tag = 'smem constant byte address 0x4 - core index']
  #allocation1 [shape = 'u32[144,128]{1,0:T(1,128)}', space=vmem, size = 0x12000, scoped, tag = 'internal scratch']
  #allocation2 [shape = 'f32[8,4]{1,0:T(8,128)}', space=vmem, size = 0x1000, scoped, tag = 'scratch operand']
  %s0 = inlined_call_operand.vmem [shape: f32[2,3,8,4], index: 0, kind: input, shape index: {}]
  %s1 = inlined_call_operand.vmem [shape: f32[2,32,3], index: 1, kind: input, shape index: {}]
  %s2 = inlined_call_operand.hbm [shape: s32[2,1,8], index: 2, kind: output, shape index: {}]
  %s3 = sld [smem:[#allocation0]]
  $region48: #{tpu_custom_call.1} parent=0
    _
  %s5 = ssub.s32 1, %s3
  %s6 = scalar_select 0, %s5, %s3
  $region1: #{tpu_custom_call.1} parent=0
    #allocation3 [shape = 'u8[1024]{0}', space=vmem, size = 0x400, scoped, tag = 'output window, operand 0']
    #allocation4 [shape = 's32[2]{0}', space=sflag, size = 0x8, scoped, tag = 'scoped memory for tpu_custom_call.1']
    %7 = vsyncpa [#allocation4], 0
    %s8 = scalar_lea.sflag [#allocation4], 1
    %9 = vsyncpa %s8, 0
    loop: start=0, step=1, limit=4
    $region2: #{tpu_custom_call.1} parent=1 // loop_pre_header
      _
    $region3: #{tpu_custom_call.1} parent=1 // loop_header
      %s11 = sphi 0, %s15
      %p12 = scmp.ge.s32.totalorder %s11, 4
      %s21 = sphi 0, %s23
      %s24 = sphi 0, %s21
      %s25 = sphi 0, %s24
      %s41 = sphi 0, %s25
      %s47 = sphi 0, %s49
      %s50 = sphi 0, %s47
      %s51 = sphi 0, %s50
      %s67 = sphi 0, %s51
      %s73 = sphi 0, %s75
      %s76 = sphi 0, %s73
      %s77 = sphi 0, %s76
      %s93 = sphi 0, %s77
    $region4: #{tpu_custom_call.1} parent=1 // loop_header_branch
      %14 = sbr.rel (%p12) target = $region8
    $region5: #{tpu_custom_call.1} parent=1 // loop_body
      %s16 = ssub.s32 %s11, 1
      %s17 = ssub.s32 %s11, 2
      %s18 = sadd.s32 %s11, 1
      %s19 = ssub.s32 %s11, %s18
      %p20 = scmp.eq.s32.totalorder %s19, 0
      %s22 = sadd.s32 %s21, 1
      %s23 = scalar_select %p20, %s21, %s22
      %p26 = pneg %p20
      %p27 = scmp.eq.s32.totalorder %s11, 1
      %p28 = por %p26, %p27
      %p29 = scmp.ne.s32.totalorder %s21, %s24
      %p30 = scmp.eq.s32.totalorder %s11, 0
      %p31 = por %p29, %p30
      %p32 = scmp.ne.s32.totalorder %s21, %s24
      %p33 = scmp.eq.s32.totalorder %s16, 1
      %p34 = por %p32, %p33
      %p35 = scmp.ne.s32.totalorder %s24, %s25
      %p36 = scmp.eq.s32.totalorder %s16, 0
      %p37 = por %p35, %p36
      %p38 = scmp.ne.s32.totalorder %s24, %s25
      %p39 = scmp.eq.s32.totalorder %s17, 1
      %p40 = por %p38, %p39
      %p42 = scmp.ne.s32.totalorder %s25, %s41
      %p43 = scmp.eq.s32.totalorder %s17, 0
      %p44 = por %p42, %p43
      %s45 = ssub.s32 %s11, %s18
      %p46 = scmp.eq.s32.totalorder %s45, 0
      %s48 = sadd.s32 %s47, 1
      %s49 = scalar_select %p46, %s47, %s48
      %p52 = pneg %p46
      %p53 = scmp.eq.s32.totalorder %s11, 1
      %p54 = por %p52, %p53
      %p55 = scmp.ne.s32.totalorder %s47, %s50
      %p56 = scmp.eq.s32.totalorder %s11, 0
      %p57 = por %p55, %p56
      %p58 = scmp.ne.s32.totalorder %s47, %s50
      %p59 = scmp.eq.s32.totalorder %s16, 1
      %p60 = por %p58, %p59
      %p61 = scmp.ne.s32.totalorder %s50, %s51
      %p62 = scmp.eq.s32.totalorder %s16, 0
      %p63 = por %p61, %p62
      %p64 = scmp.ne.s32.totalorder %s50, %s51
      %p65 = scmp.eq.s32.totalorder %s17, 1
      %p66 = por %p64, %p65
      %p68 = scmp.ne.s32.totalorder %s51, %s67
      %p69 = scmp.eq.s32.totalorder %s17, 0
      %p70 = por %p68, %p69
      %s71 = ssub.s32 %s11, %s18
      %p72 = scmp.eq.s32.totalorder %s71, 0
      %s74 = sadd.s32 %s73, 1
      %s75 = scalar_select %p72, %s73, %s74
      %p78 = pneg %p72
      %p79 = scmp.eq.s32.totalorder %s11, 1
      %p80 = por %p78, %p79
      %p81 = scmp.ne.s32.totalorder %s73, %s76
      %p82 = scmp.eq.s32.totalorder %s11, 0
      %p83 = por %p81, %p82
      %p84 = scmp.ne.s32.totalorder %s73, %s76
      %p85 = scmp.eq.s32.totalorder %s16, 1
      %p86 = por %p84, %p85
      %p87 = scmp.ne.s32.totalorder %s76, %s77
      %p88 = scmp.eq.s32.totalorder %s16, 0
      %p89 = por %p87, %p88
      %p90 = scmp.ne.s32.totalorder %s76, %s77
      %p91 = scmp.eq.s32.totalorder %s17, 1
      %p92 = por %p90, %p91
      %p94 = scmp.ne.s32.totalorder %s77, %s93
      %p95 = scmp.eq.s32.totalorder %s17, 0
      %p96 = por %p94, %p95
      %p97 = scmp.le.s32.totalorder 1, %s11
      %p98 = scmp.lt.s32.totalorder %s11, 3
      %p99 = pnand %p97, %p98
      %p100 = pneg %p99
      // Predicated region
      $region9: #{tpu_custom_call.1} parent=5 // pred_check
        _
      $region10: #{tpu_custom_call.1} parent=5 // pred_check_branch
        %102 = sbr.rel (%p99) target = $region12
      $region11: #{tpu_custom_call.1} parent=5 // pred_region
        %s103 = ssub.s32 %s11, 1
      $region12: #{tpu_custom_call.1} parent=5 // pred_fallthru
        _
      %p104 = scmp.lt.s32.totalorder %s11, 2
      // Predicated region
      $region13: #{tpu_custom_call.1} parent=5 // pred_check
        %p105 = pneg %p104
      $region14: #{tpu_custom_call.1} parent=5 // pred_check_branch
        %107 = sbr.rel (%p105) target = $region16
      $region15: #{tpu_custom_call.1} parent=5 // pred_region
        // Predicated region
        $region17: #{tpu_custom_call.1} parent=15 // pred_check
          %p108 = pneg %p31
        $region18: #{tpu_custom_call.1} parent=15 // pred_check_branch
          %110 = sbr.rel (%p108) target = $region20
        $region19: #{tpu_custom_call.1} parent=15 // pred_region
          %p111 = scmp.lt.s32.totalorder %s11, 1
          %s112 = scalar_select %p111, %s11, 1
          %s113 = smul.addr %s112, 3
          %s114 = smul.addr %s113, 8
          %s115 = scalar_lea.vmem %s0, %s114
        $region20: #{tpu_custom_call.1} parent=15 // pred_fallthru
          _
        // Predicated region
        $region21: #{tpu_custom_call.1} parent=15 // pred_check
          %p116 = pneg %p57
        $region22: #{tpu_custom_call.1} parent=15 // pred_check_branch
          %118 = sbr.rel (%p116) target = $region24
        $region23: #{tpu_custom_call.1} parent=15 // pred_region
          %p119 = scmp.lt.s32.totalorder %s11, 1
          %s120 = scalar_select %p119, %s11, 1
          %s121 = smul.addr %s120, 4
          %s122 = smul.addr %s121, 8
          %s123 = scalar_lea.vmem %s1, %s122
        $region24: #{tpu_custom_call.1} parent=15 // pred_fallthru
          _
      $region16: #{tpu_custom_call.1} parent=5 // pred_fallthru
        _
      %p124 = scmp.le.s32.totalorder 1, %s11
      %p125 = scmp.lt.s32.totalorder %s11, 3
      %p126 = pnand %p124, %p125
      %p127 = pneg %p126
      // Predicated region
      $region25: #{tpu_custom_call.1} parent=5 // pred_check
        _
      $region26: #{tpu_custom_call.1} parent=5 // pred_check_branch
        %129 = sbr.rel (%p126) target = $region28
      $region27: #{tpu_custom_call.1} parent=5 // pred_region
        %s130 = ssub.s32 %s11, 1
        %p131 = scmp.lt.s32.totalorder %s16, 1
        %s132 = scalar_select %p131, %s16, 1
        %s133 = smul.addr %s132, 3
        %s134 = smul.addr %s133, 8
        %s135 = scalar_lea.vmem %s0, %s134
        %p136 = pneg %p37
        %p137 = pneg %p34
        %p138 = scmp.lt.s32.totalorder %s16, 1
        %s139 = scalar_select %p138, %s16, 1
        %s140 = smul.addr %s139, 4
        %s141 = smul.addr %s140, 8
        %s142 = scalar_lea.vmem %s1, %s141
        %p143 = pneg %p63
        %p144 = pneg %p60
        %p145 = pneg %p89
        %p146 = pneg %p86
        %s147 = sand.u32 %s76, 1
        %s148 = scalar_lea.sflag [#allocation4], %s147
        %s149 = sand.u32 %s76, 1
        %s150 = scalar_lea.vmem [#allocation3], %s149
        %p151 = scmp.lt.s32.totalorder %s16, 1
        %s152 = scalar_select %p151, %s16, 1
        %s153 = smul.addr %s152, 3
        %s154 = smul.addr %s153, 8
        %s155 = scalar_lea.vmem %s0, %s154
        %p156 = scmp.lt.s32.totalorder %s16, 1
        %s157 = scalar_select %p156, %s16, 1
        %s158 = smul.addr %s157, 4
        %s159 = smul.addr %s158, 8
        %s160 = scalar_lea.vmem %s1, %s159
        %v161 = vlaneseq
        %v162 = vshrl.u32 %v161, 7
        %v163 = vmul.u32 %v162, 4
        %v164 = vlaneseq
        %v165 = vand.u32 %v164, 127
        %v166 = vadd.s32 %v163, %v165
        %v167 = vsub.s32 31, %v166
        %v168 = vld [vmem:[%s155] sm:$0xff]
        %v169 = vmul.f32 %v168, %v168
        %v170 = vadd.f32 %v169, 0.0
        %s171 = scalar_lea.vmem %s155, 8
        %v172 = vld [vmem:[%s171] sm:$0xff]
        %v173 = vmul.f32 %v172, %v172
        %v174 = vadd.f32 %v170, %v173
        %s175 = scalar_lea.vmem %s155, 16
        %v176 = vld [vmem:[%s175] sm:$0xff]
        %v177 = vmul.f32 %v176, %v176
        %v178 = vadd.f32 %v174, %v177
        %vm179 = vcmask 31744
        %180 = vst.msk [vmem:[#allocation2] sm:$0xff] %vm179, 1e+10
        loop: start=0, step=1, limit=8
        $region29: #{tpu_custom_call.1} parent=27 // loop_pre_header
          _
        $region30: #{tpu_custom_call.1} parent=27 // loop_header
          %s182 = sphi 0, %s186
          %p183 = scmp.ge.s32.totalorder %s182, 8
          %s187 = sphi 0, %s268
          %v188 = vphi 0, %v192
        $region31: #{tpu_custom_call.1} parent=27 // loop_header_branch
          %185 = sbr.rel (%p183) target = $region35
        $region32: #{tpu_custom_call.1} parent=27 // loop_body
          %v189 = vstv %s182
          %vm190 = vcmp.eq.s32.totalorder %v165, %v189
          %v191 = vstv %s187
          %v192 = vsel %vm190, %v191, %v188
          %s193 = scalar_lea.vmem %s160, %s187
          %v194 = vld [vmem:[%s193] sm:$0x1]
          %v195 = vld [vmem:[%s155] sm:$0xff]
          %s197 = vtos %v194
          %v198 = vstv %s197
          %v200 = vmul.f32 %v198, %v195
          %v201 = vadd.f32 %v200, 0.0
          %v202 = vmul.f32 %v194, %v194
          %v203 = vadd.f32 %v202, 0.0
          %v204 = vld [vmem:[%s171] sm:$0xff]
          %205 = vrot.lane.b32.xlu0 %v194, 127
          %v206 = vpop.permute.xlu0 %205
          %s207 = vtos %v206
          %v208 = vstv %s207
          %v210 = vmul.f32 %v208, %v204
          %v211 = vadd.f32 %v201, %v210
          %213 = vrot.lane.b32.xlu0 %v202, 127
          %v214 = vpop.permute.xlu0 %213
          %v216 = vadd.f32 %v203, %v214
          %v217 = vld [vmem:[%s175] sm:$0xff]
          %218 = vrot.lane.b32.xlu0 %v194, 126
          %v219 = vpop.permute.xlu0 %218
          %s220 = vtos %v219
          %v221 = vstv %s220
          %v223 = vmul.f32 %v221, %v217
          %v224 = vadd.f32 %v211, %v223
          %225 = vrot.lane.b32.xlu0 %v202, 126
          %v226 = vpop.permute.xlu0 %225
          %v228 = vadd.f32 %v216, %v226
          %s230 = vtos %v228
          %v231 = vstv %s230
          %v233 = vadd.f32 %v178, %v231
          %v234 = vmul.f32 %v224, 2.0
          %v235 = vsub.f32 %v233, %v234
          %v236 = vld [vmem:[#allocation2] sm:$0xff]
          %v237 = vmin.f32 %v236, %v235
          %238 = vst.msk [vmem:[#allocation2] sm:$0xff] %vm179, %v237
          %v240 = vand.u32 %v237, 4294967264
          %v241 = vor.u32 %v240, %v167
          %v242 = vsel %vm179, %v241, 2147483648
          %v243 = vand.u32 %v242, 65535
          %v244 = vshra.s32 %v242, 16
          %v245 = vcvt.s32.f32 %v243
          %v246 = vcvt.s32.f32 %v244
          %247 = vmax.xlane.f32.xlu0 %v246
          %v248 = vpop.xlane.xlu0 %247
          %vm249 = vcmp.eq.f32.partialorder %v246, %v248
          %v250 = vsel %vm249, %v245, -inf
          %251 = vmax.xlane.f32.xlu0 %v250
          %v252 = vpop.xlane.xlu0 %251
          %v253 = vcvt.f32.s32 %v252
          %v254 = vcvt.f32.s32 %v248
          %v255 = vshll.u32 %v254, 16
          %v256 = vadd.s32 %v255, %v253
          %v257 = vrot.slane %v256, 4
          %vm258 = vcmp.gt.s32.totalorder %v256, %v257
          %v259 = vsel %vm258, %v256, %v257
          %v260 = vrot.slane %v259, 2
          %vm261 = vcmp.gt.s32.totalorder %v259, %v260
          %v262 = vsel %vm261, %v259, %v260
          %v263 = vrot.slane %v262, 1
          %vm264 = vcmp.gt.s32.totalorder %v262, %v263
          %v265 = vsel %vm264, %v262, %v263
          %s266 = vtos %v265
          %s267 = sand.u32 %s266, 31
          %s268 = ssub.s32 31, %s267
        $region33: #{tpu_custom_call.1} parent=27 // loop_footer
          %s186 = sadd.s32 1, %s182
        $region34: #{tpu_custom_call.1} parent=27 // loop_footer_branch
          %181 = sbr.rel target = $region30
        $region35: #{tpu_custom_call.1} parent=27 // loop_exit
          _
        %vm269 = vcmask 57344
        %270 = vst.msk [vmem:[%s150] sm:$0x1] %vm269, %v188
        %s271 = sand.u32 %s76, 1
        %s272 = scalar_lea.sflag [#allocation4], %s271
        %s273 = sand.u32 %s76, 1
        %s274 = scalar_lea.vmem [#allocation3], %s273
        // Predicated region
        $region36: #{tpu_custom_call.1} parent=27 // pred_check
          %p275 = pneg %p86
        $region37: #{tpu_custom_call.1} parent=27 // pred_check_branch
          %277 = sbr.rel (%p275) target = $region39
        $region38: #{tpu_custom_call.1} parent=27 // pred_region
          %s279 = ssub.s32 16, 16
          %280 = vsyncadd %s272, %s279
          %s281 = smul.addr %s16, 16
          %s282 = scalar_lea.hbm %s2, %s281
          %s284 = sshll.u32 %s274, 4
          %s285 = int_to_ptr.vmem [resolvable:$true] %s284
          %287 = dma.vmem_to_hbm [thread:$0]  %s285, 16, %s282, %s272
        $region39: #{tpu_custom_call.1} parent=27 // pred_fallthru
          _
      $region28: #{tpu_custom_call.1} parent=5 // pred_fallthru
        _
      %p288 = scmp.le.s32.totalorder 2, %s11
      // Predicated region
      $region40: #{tpu_custom_call.1} parent=5 // pred_check
        %p289 = pneg %p288
      $region41: #{tpu_custom_call.1} parent=5 // pred_check_branch
        %291 = sbr.rel (%p289) target = $region43
      $region42: #{tpu_custom_call.1} parent=5 // pred_region
        %s292 = ssub.s32 %s11, 2
        // Predicated region
        $region44: #{tpu_custom_call.1} parent=42 // pred_check
          %p293 = pneg %p92
        $region45: #{tpu_custom_call.1} parent=42 // pred_check_branch
          %295 = sbr.rel (%p293) target = $region47
        $region46: #{tpu_custom_call.1} parent=42 // pred_region
          %s296 = sand.u32 %s77, 1
          %s297 = scalar_lea.sflag [#allocation4], %s296
          %s298 = sand.u32 %s77, 1
          %s299 = scalar_lea.vmem [#allocation3], %s298
          %300 = dma.done %s297, 16
        $region47: #{tpu_custom_call.1} parent=42 // pred_fallthru
          _
      $region43: #{tpu_custom_call.1} parent=5 // pred_fallthru
        _
    $region6: #{tpu_custom_call.1} parent=1 // loop_footer
      %s15 = sadd.s32 1, %s11
    $region7: #{tpu_custom_call.1} parent=1 // loop_footer_branch
      %10 = sbr.rel target = $region3
    $region8: #{tpu_custom_call.1} parent=1 // loop_exit
      _
    %301 = vsyncpa [#allocation4], 1
    %s302 = scalar_lea.sflag [#allocation4], 1
    %303 = vsyncpa %s302, 1

</llo_original>
